<compile_context>
chip_gen: v7x
topology: tpu7x:2x2x1
jax: 0.10.0
libtpu: 0.0.40
codegen_flags: <defaults>
</compile_context>

<pallas_src>
from dataclasses import dataclass
from typing import List, Optional

import numpy as np
import jax
import jax.numpy as jnp
from jax import lax
from jax.experimental import pallas as pl
from jax.experimental.pallas import tpu as pltpu


@dataclass
class EmbeddingFactorLists:
    """Holds the embedding factors for each modality (lists of (A, B, E) arrays)."""
    user_embedding_factors: List[jnp.ndarray]
    item_embedding_factors: List[jnp.ndarray]
    text_embedding_factors: Optional[List[jnp.ndarray]] = None
    image_embedding_factors: Optional[List[jnp.ndarray]] = None


def _round_up(x: int, m: int) -> int:
    return ((x + m - 1) // m) * m


# ----------------------------------------------------------------------------
# Kernel 1: pairwise (BPR-style) ranking loss, lane-dense batch tiles
# ----------------------------------------------------------------------------
def _bpr_kernel(scores_ref, out_ref):
    @pl.when(pl.program_id(0) == 0)
    def _():
        out_ref[...] = jnp.zeros_like(out_ref)

    s = scores_ref[...]                                     # (C, TB), batch on lanes
    r_pos = s[0:1, :]                                       # (1, TB)
    r_neg = jnp.max(s[1:, :], axis=0, keepdims=True)        # (1, TB) sublane reduce
    x = r_neg - r_pos                                       # == -(r_pos - r_neg)
    # numerically stable softplus (matches torch.nn.Softplus, beta=1)
    sp = jnp.maximum(x, 0.0) + jnp.log1p(jnp.exp(-jnp.abs(x)))   # (1, TB)

    # reduce TB lanes to a lane-dense (1, 128) partial via static 128-wide slices
    # (no reshape / cross-lane reduce needed; lanes are summed in JAX afterwards).
    TB = sp.shape[1]
    acc = sp[:, 0:128]
    for k in range(1, TB // 128):
        acc = acc + sp[:, k * 128:(k + 1) * 128]
    out_ref[...] += acc


def bpr_loss(rating_scores: jnp.ndarray) -> jnp.ndarray:
    B, C = rating_scores.shape
    if C < 2:
        raise ValueError("rating_scores must have at least one negative column (C >= 2)")

    scores_t = rating_scores.astype(jnp.float32).T          # (C, B), batch lane-dense

    # large tiles: per-grid-step overhead dominates this tiny kernel otherwise
    TB = min(_round_up(B, 128), 4096)
    Bp = _round_up(B, TB)
    if Bp != B:
        pad = Bp - B
        # padded columns contribute exactly 0: softplus(-huge) == 0
        pad_block = jnp.concatenate(
            [jnp.zeros((1, pad), jnp.float32),
             jnp.full((C - 1, pad), -1e30, jnp.float32)], axis=0)
        scores_t = jnp.concatenate([scores_t, pad_block], axis=1)

    out = pl.pallas_call(
        _bpr_kernel,
        grid=(Bp // TB,),
        in_specs=[pl.BlockSpec((C, TB), lambda i: (0, i))],
        out_specs=pl.BlockSpec((1, 128), lambda i: (0, 0)),
        out_shape=jax.ShapeDtypeStruct((1, 128), jnp.float32),
        # resident accumulator => the grid axis must stay sequential ("arbitrary")
        compiler_params=pltpu.CompilerParams(
            dimension_semantics=("arbitrary",)),
        cost_estimate=pl.CostEstimate(flops=6 * Bp * C,
                                      transcendentals=2 * Bp,
                                      bytes_accessed=Bp * C * 4 + 512),
    )(scores_t)
    return jnp.sum(out)


# ----------------------------------------------------------------------------
# Kernel 2: distance-correlation over factor pairs (disentangled loss hot path)
# ----------------------------------------------------------------------------
def _centered_dist(Z):
    """Double-centered pairwise Euclidean distance matrix via Gram form (MXU)."""
    ZZ = Z * Z
    # squared row norms, (B, 1): cheap (B, E) lane reduce straight from Z
    sq_row = jnp.sum(ZZ, axis=1, keepdims=True)
    # (B, B) matrix with ||z_j||^2 replicated down every row: ones(B,E) contracted with
    # ZZ over E on the MXU.  Avoids both the iota/where diag extraction (two (B,B)
    # int32 temps + two full (B,B) reductions) and a sublane->lane transpose of sq_row.
    sq_col = lax.dot_general(jnp.ones_like(Z), ZZ, (((1,), (1,)), ((), ())),
                             preferred_element_type=jnp.float32)           # (B, B)
    G = lax.dot_general(Z, Z, (((1,), (1,)), ((), ())),
                        preferred_element_type=jnp.float32)                # (B, B)
    d2 = jnp.maximum(sq_row + sq_col - 2.0 * G, 0.0)                       # clamp cancel
    D = jnp.sqrt(d2 + jnp.float32(1e-8))                                   # (B, B)
    row_mean = jnp.mean(D, axis=1, keepdims=True)                          # (B, 1)
    col_mean = jnp.mean(D, axis=0, keepdims=True)                          # (1, B)
    grand = jnp.mean(row_mean, axis=0, keepdims=True)                      # (1, 1)
    return D - row_mean - col_mean + grand


def _dcor_kernel(pair_i_ref, pair_j_ref, x_ref, y_ref, out_ref):
    # x_ref, y_ref: (B, E) factor block for one (pair p, sample a) grid point.
    # out_ref: (1, 128) lane-dense per-pair partial, accumulated across the A axis.
    @pl.when(pl.program_id(1) == 0)
    def _():
        out_ref[...] = jnp.zeros_like(out_ref)

    Bn = x_ref.shape[0]
    inv_n2 = jnp.float32(1.0 / (Bn * Bn))
    eps = jnp.float32(1e-5)

    DX = _centered_dist(x_ref[...])
    DY = _centered_dist(y_ref[...])

    def dcov(M, N):
        return jnp.sqrt(jnp.maximum(jnp.sum(M * N, keepdims=True) * inv_n2, eps))

    cov_xy = dcov(DX, DY)                                   # (1, 1)
    var_x = dcov(DX, DX)
    var_y = dcov(DY, DY)
    dcor = cov_xy * lax.rsqrt(var_x * var_y)                # EUP rsqrt
    out_ref[...] += jnp.broadcast_to(dcor, out_ref.shape)   # lane-dense store


def dcor_pair_sum(factors: jnp.ndarray,
                  pair_i: jnp.ndarray,
                  pair_j: jnp.ndarray) -> jnp.ndarray:
    """factors: (F, A, B, E) stacked factor tensor; pair_i / pair_j: (P,) int32 indices.

    Returns (P,) per-pair sums over A of distance correlation.
    """
    F, A, B, E = factors.shape
    P = int(pair_i.shape[0])

    # Rough per-step VMEM: a few (B, B) f32 temporaries + double-buffered (B, E) input
    # blocks.  Clamp to 56 MiB so it stays inside v7x's 64 MiB physical VMEM while
    # still lifting the 16/32 MiB scoped defaults on v5e/v6e when B is large.
    # TODO(synk): for B >= ~2048, tile the (B, B) distance work in row blocks.
    est = 4 * (10 * B * B + 8 * B * E) + (1 << 20)
    vmem_limit = int(min(56 * 1024 * 1024, max(32 * 1024 * 1024, est)))

    flops = int(P * A * (3 * 2 * B * B * E + 30 * B * B))
    transcendentals = int(P * A * (2 * B * B + 8))
    bytes_accessed = int(2 * P * A * B * E * 4 + P * 128 * 4)

    out = pl.pallas_call(
        _dcor_kernel,
        grid_spec=pltpu.PrefetchScalarGridSpec(
            num_scalar_prefetch=2,
            grid=(P, A),
            in_specs=[
                pl.BlockSpec((None, None, B, E),
                             lambda p, a, pi, pj: (pi[p], a, 0, 0)),
                pl.BlockSpec((None, None, B, E),
                             lambda p, a, pi, pj: (pj[p], a, 0, 0)),
            ],
            out_specs=pl.BlockSpec((None, 1, 128),
                                   lambda p, a, pi, pj: (p, 0, 0)),
        ),
        out_shape=jax.ShapeDtypeStruct((P, 1, 128), jnp.float32),
        compiler_params=pltpu.CompilerParams(
            dimension_semantics=("parallel", "arbitrary"),
            vmem_limit_bytes=vmem_limit),
        cost_estimate=pl.CostEstimate(flops=flops,
                                      transcendentals=transcendentals,
                                      bytes_accessed=bytes_accessed),
    )(pair_i, pair_j, factors, factors)
    return out[:, 0, 0]


# ----------------------------------------------------------------------------
# DMRLLoss forward
# ----------------------------------------------------------------------------
def dmrl_loss(embedding_factor_lists: EmbeddingFactorLists,
              rating_scores: jnp.ndarray,
              *, decay_c: float, num_factors: int, num_neg: int) -> jnp.ndarray:
    loss_bpr = bpr_loss(rating_scores)
    if decay_c <= 0:
        return loss_bpr

    # same (odd) loop bounds as cornac's DistanceCorrelationCalculator
    pairs = [(i, j) for i in range(0, num_factors - 2)
             for j in range(i + 1, num_factors - 1)]

    modalities = [m for m in (embedding_factor_lists.user_embedding_factors,
                              embedding_factor_lists.item_embedding_factors,
                              embedding_factor_lists.text_embedding_factors,
                              embedding_factor_lists.image_embedding_factors)
                  if m is not None and len(m) > 0 and m[0].size > 0]

    cor_sum = jnp.float32(0.0)
    if pairs and modalities:
        # Build ONE stacked factor tensor (only the factors that appear in pairs),
        # zero-padded along E to the max factor dim (zero columns leave pairwise
        # distances unchanged), and index it per pair via scalar prefetch.  Pairs are
        # ordered i-major per modality so consecutive pairs share the LHS factor.
        e_max = max(int(m[0].shape[-1]) for m in modalities)
        n_used = max(num_factors - 1, 0)
        factor_list, pair_i, pair_j = [], [], []
        for factors in modalities:
            base = len(factor_list)
            d = int(factors[0].shape[-1])
            for f in factors[:n_used]:
                f32 = f.astype(jnp.float32)
                if d != e_max:
                    f32 = jnp.pad(f32, ((0, 0), (0, 0), (0, e_max - d)))
                factor_list.append(f32)
            for (i, j) in pairs:                      # i-major ordering
                pair_i.append(base + i)
                pair_j.append(base + j)
        factors_stack = jnp.stack(factor_list)        # (F_total, A, B, E_max)
        pair_i = jnp.asarray(pair_i, dtype=jnp.int32)  # (P_total,)
        pair_j = jnp.asarray(pair_j, dtype=jnp.int32)
        cor_sum = jnp.sum(dcor_pair_sum(factors_stack, pair_i, pair_j))

    disentangled = cor_sum / ((num_factors + 1.0) * num_factors / 2.0)
    return loss_bpr + decay_c * disentangled


# ----------------------------------------------------------------------------
# Pure-JAX reference (mirrors the torch code 1:1) for correctness check
# ----------------------------------------------------------------------------
def _ref_cent_dist(X):
    first = X[:, None, :, :]
    second = X[:, :, None, :]
    D = jnp.sqrt(jnp.sum(jnp.square(first - second), axis=-1) + 1e-8)
    row_mean = jnp.mean(D, axis=2, keepdims=True)
    col_mean = jnp.mean(D, axis=1, keepdims=True)
    grand = jnp.mean(row_mean, axis=1, keepdims=True)
    return D - row_mean - col_mean + grand


def _ref_cov(X, Y):
    Xc = _ref_cent_dist(X)
    Yc = _ref_cent_dist(Y)
    n = X.shape[1]
    return jnp.sqrt(jnp.maximum(jnp.sum(Xc * Yc, axis=(1, 2)) / (n * n), 1e-5))


def _ref_cor(X, Y):
    return _ref_cov(X, Y) / jnp.sqrt(_ref_cov(X, X) * _ref_cov(Y, Y))


def ref_dmrl_loss(efl, rating_scores, decay_c, num_factors, num_neg):
    r_pos = rating_scores[:, 0]
    r_neg = jnp.max(rating_scores[:, 1:], axis=1)
    loss_bpr = jnp.sum(jax.nn.softplus(-(r_pos - r_neg)))
    if decay_c <= 0:
        return loss_bpr
    cor_loss = jnp.zeros((1,), jnp.float32)
    for i in range(0, num_factors - 2):
        for j in range(i + 1, num_factors - 1):
            cor_loss = cor_loss + _ref_cor(efl.user_embedding_factors[i], efl.user_embedding_factors[j])
            cor_loss = cor_loss + _ref_cor(efl.item_embedding_factors[i], efl.item_embedding_factors[j])
            cor_loss = cor_loss + _ref_cor(efl.text_embedding_factors[i], efl.text_embedding_factors[j])
            cor_loss = cor_loss + _ref_cor(efl.image_embedding_factors[i], efl.image_embedding_factors[j])
    dis = jnp.sum(cor_loss) / ((num_factors + 1.0) * num_factors / 2.0)
    return loss_bpr + decay_c * jnp.sum(dis)


# ----------------------------------------------------------------------------
if __name__ == "__main__":
    key = jax.random.PRNGKey(0)
    batch = 8
    num_neg = 4
    num_factors = 4
    decay_c = 0.1
    A = 1 + num_neg

    # per-factor embedding dim for each modality
    dims = {"user": 16, "item": 16, "text": 8, "image": 32}

    keys = jax.random.split(key, 1 + 4 * num_factors)
    rating_scores = jax.random.normal(keys[0], (batch, 1 + num_neg), jnp.float32)

    def make_factors(ks, d):
        return [jax.random.normal(k, (A, batch, d), jnp.float32) * 0.5 for k in ks]

    efl = EmbeddingFactorLists(
        user_embedding_factors=make_factors(keys[1:1 + num_factors], dims["user"]),
        item_embedding_factors=make_factors(keys[1 + num_factors:1 + 2 * num_factors], dims["item"]),
        text_embedding_factors=make_factors(keys[1 + 2 * num_factors:1 + 3 * num_factors], dims["text"]),
        image_embedding_factors=make_factors(keys[1 + 3 * num_factors:1 + 4 * num_factors], dims["image"]),
    )

    loss = dmrl_loss(efl, rating_scores,
                     decay_c=decay_c, num_factors=num_factors, num_neg=num_neg)
    loss = jax.block_until_ready(loss)

    ref = ref_dmrl_loss(efl, rating_scores, decay_c, num_factors, num_neg)
    assert np.allclose(np.asarray(loss), np.asarray(ref), rtol=2e-3, atol=2e-3), (
        float(loss), float(ref))

    print("KERNEL_OK")
</pallas_src>

<mosaic_0001>
module attributes {stable_mosaic.version = 11 : i64} {
  func.func @_bpr_kernel(%arg0: i32, %arg1: memref<5x128xf32, #tpu.memory_space<vmem>>, %arg2: memref<1x128xf32, #tpu.memory_space<vmem>>) attributes {dimension_semantics = [#tpu.dimension_semantics<arbitrary>], iteration_bounds = array<i64: 1>, scalar_prefetch = 0 : i64, scratch_operands = 0 : i64, tpu.core_type = #tpu.core_type<tc>, window_params = [{transform_indices = @transform_0, window_bounds = array<i64: 5, 128>}, {pipeline_mode = #tpu.pipeline_mode<synchronous>, transform_indices = @transform_1, window_bounds = array<i64: 1, 128>}]} {
    %c0_i32 = arith.constant 0 : i32
    %0 = arith.cmpi eq, %arg0, %c0_i32 : i32
    %1 = arith.extui %0 : i1 to i32
    %c0_i32_0 = arith.constant 0 : i32
    %2 = arith.cmpi ne, %1, %c0_i32_0 : i32
    scf.if %2 {
      %cst_8 = arith.constant 0.000000e+00 : f32
      %20 = vector.broadcast %cst_8 : f32 to vector<1x128xf32>
      %c0_9 = arith.constant 0 : index
      %c0_10 = arith.constant 0 : index
      %21 = vector.load %arg2[%c0_9, %c0_10] : memref<1x128xf32, #tpu.memory_space<vmem>>, vector<1x128xf32>
      tpu.vector_store %arg2[%c0_9, %c0_10], %20 {strides = array<i32>} : memref<1x128xf32, #tpu.memory_space<vmem>>, vector<1x128xf32>,
    } else {
    }
    %c0 = arith.constant 0 : index
    %c0_1 = arith.constant 0 : index
    %3 = vector.load %arg1[%c0, %c0_1] : memref<5x128xf32, #tpu.memory_space<vmem>>, vector<5x128xf32>
    %4 = vector.extract_strided_slice %3 {offsets = [0, 0], sizes = [1, 128], strides = [1, 1]} : vector<5x128xf32> to vector<1x128xf32>
    %5 = vector.extract_strided_slice %3 {offsets = [1, 0], sizes = [4, 128], strides = [1, 1]} : vector<5x128xf32> to vector<4x128xf32>
    %cst = arith.constant dense<0xFF800000> : vector<128xf32>
    %6 = vector.multi_reduction <maximumf>, %5, %cst [0] : vector<4x128xf32> to vector<128xf32>
    %7 = vector.shape_cast %6 : vector<128xf32> to vector<1x128xf32>
    %8 = arith.subf %7, %4 : vector<1x128xf32>
    %cst_2 = arith.constant 0.000000e+00 : f32
    %9 = vector.broadcast %cst_2 : f32 to vector<1x128xf32>
    %10 = arith.maximumf %8, %9 : vector<1x128xf32>
    %11 = math.absf %8 : vector<1x128xf32>
    %cst_3 = arith.constant 0.000000e+00 : f32
    %12 = vector.broadcast %cst_3 : f32 to vector<1x128xf32>
    %13 = arith.subf %12, %11 : vector<1x128xf32>
    %14 = math.exp %13 : vector<1x128xf32>
    %15 = math.log1p %14 : vector<1x128xf32>
    %16 = arith.addf %10, %15 : vector<1x128xf32>
    %c0_4 = arith.constant 0 : index
    %c0_5 = arith.constant 0 : index
    %17 = vector.load %arg2[%c0_4, %c0_5] : memref<1x128xf32, #tpu.memory_space<vmem>>, vector<1x128xf32>
    %18 = arith.addf %17, %16 : vector<1x128xf32>
    %c0_6 = arith.constant 0 : index
    %c0_7 = arith.constant 0 : index
    %19 = vector.load %arg2[%c0_6, %c0_7] : memref<1x128xf32, #tpu.memory_space<vmem>>, vector<1x128xf32>
    tpu.vector_store %arg2[%c0_6, %c0_7], %18 {strides = array<i32>} : memref<1x128xf32, #tpu.memory_space<vmem>>, vector<1x128xf32>,
    return
  }
  func.func @transform_0(%arg0: i32) -> (i32, i32) {
    %c0_i32 = arith.constant 0 : i32
    %c0_i32_0 = arith.constant 0 : i32
    return %c0_i32, %arg0 : i32, i32
  }
  func.func @transform_1(%arg0: i32) -> (i32, i32) {
    %c0_i32 = arith.constant 0 : i32
    %c0_i32_0 = arith.constant 0 : i32
    %c0_i32_1 = arith.constant 0 : i32
    return %c0_i32, %c0_i32_0 : i32, i32
  }
}

</mosaic_0001>

<llo_original>
// kernel: tpu_custom_call.1
$region0: #{tpu_custom_call.1}
  #allocation0 [shape = 'u32[]', space=smem, size = 0x4, offset = 0x4, fixed_abs, tag = 'smem constant byte address 0x4 - core index']
  #allocation1 [shape = 'u32[144,128]{1,0:T(1,128)}', space=vmem, size = 0x12000, scoped, tag = 'internal scratch']
  %s0 = inlined_call_operand.hbm [shape: f32[5,128], index: 0, kind: input, shape index: {}]
  %s1 = inlined_call_operand.hbm [shape: f32[1,128], index: 1, kind: output, shape index: {}]
  %s2 = sld [smem:[#allocation0]]
  $region22: #{tpu_custom_call.1} parent=0
    _
  %s4 = ssub.s32 1, %s2
  %s5 = scalar_select 0, %s4, %s2
  $region1: #{tpu_custom_call.1} parent=0
    #allocation2 [shape = 'u8[4096]{0}', space=vmem, size = 0x1000, scoped, tag = 'input window, operand 0, single buffered']
    #allocation3 [shape = 's32[1]{0}', space=sflag, size = 0x4, scoped, tag = 'scoped memory for tpu_custom_call.1']
    #allocation4 [shape = 's32[1]{0}', space=sflag, size = 0x4, scoped, tag = 'scoped memory for tpu_custom_call.1']
    #allocation5 [shape = 'u8[512]{0}', space=vmem, size = 0x400, scoped, tag = 'output window, operand 0, single buffered']
    %6 = vsyncpa [#allocation3], 0
    %7 = vsyncpa [#allocation4], 0
    // Predicated region
    $region2: #{tpu_custom_call.1} parent=1 // pred_check
      _
    $region3: #{tpu_custom_call.1} parent=1 // pred_check_branch
      %9 = sbr.rel (0) target = $region5
    $region4: #{tpu_custom_call.1} parent=1 // pred_region
      %s11 = ssub.s32 128, 128
      %12 = vsyncadd [#allocation3], %s11
      %s14 = sshll.u32 [#allocation2], 4
      %s15 = int_to_ptr.vmem [resolvable:$true] %s14
      %17 = dma.hbm_to_vmem [thread:$0]  %s0, 128, %s15, [#allocation3]
    $region5: #{tpu_custom_call.1} parent=1 // pred_fallthru
      _
    // Predicated region
    $region6: #{tpu_custom_call.1} parent=1 // pred_check
      _
    $region7: #{tpu_custom_call.1} parent=1 // pred_check_branch
      %19 = sbr.rel (0) target = $region9
    $region8: #{tpu_custom_call.1} parent=1 // pred_region
      %20 = dma.done [#allocation3], 128
    $region9: #{tpu_custom_call.1} parent=1 // pred_fallthru
      _
    %p21 = scmp.eq.s32.totalorder 0, 0
    // Predicated region
    $region10: #{tpu_custom_call.1} parent=1 // pred_check
      %p22 = pneg %p21
    $region11: #{tpu_custom_call.1} parent=1 // pred_check_branch
      %24 = sbr.rel (%p22) target = $region13
    $region12: #{tpu_custom_call.1} parent=1 // pred_region
      %25 = vst [vmem:[#allocation5] sm:$0x1] 0.0
    $region13: #{tpu_custom_call.1} parent=1 // pred_fallthru
      _
    %v26 = vld [vmem:[#allocation2] sm:$0x1f]
    %vm27 = vcmask 1044481
    %v28 = vsel %vm27, %v26, -inf
    %v29 = vrot.slane %v28, 4
    %v30 = vmax.f32 %v28, %v29
    %v31 = vrot.slane %v30, 2
    %v32 = vmax.f32 %v30, %v31
    %v33 = vrot.slane %v32, 1
    %v34 = vmax.f32 %v32, %v33
    %v35 = vsub.f32 %v34, %v26
    %v36 = vmax.f32 %v35, 0.0
    %v37 = vand.u32 2147483647, %v35
    %v38 = vsub.f32 0.0, %v37
    %v39 = vmul.f32 %v38, 1.442695
    %v40 = vpow.pop %v39
    %v41 = vadd.f32 %v40, 1.0
    %v42 = vlog2.pop %v41
    %v43 = vmul.f32 %v42, 0.6931472
    %v44 = vmul.f32 -0.5, %v40
    %v45 = vadd.f32 %v44, 1.0
    %v46 = vmul.f32 %v45, %v40
    %v47 = vand.u32 2147483647, %v40
    %vm48 = vcmp.lt.f32.partialorder %v47, 0.0004427343
    %v49 = vsel %vm48, %v46, %v43
    %v50 = vadd.f32 %v36, %v49
    %v51 = vld [vmem:[#allocation5] sm:$0x1]
    %v52 = vadd.f32 %v51, %v50
    %53 = vst [vmem:[#allocation5] sm:$0x1] %v52
    // Predicated region
    $region14: #{tpu_custom_call.1} parent=1 // pred_check
      _
    $region15: #{tpu_custom_call.1} parent=1 // pred_check_branch
      %55 = sbr.rel (0) target = $region17
    $region16: #{tpu_custom_call.1} parent=1 // pred_region
      %s57 = ssub.s32 16, 16
      %58 = vsyncadd [#allocation4], %s57
      %s60 = sshll.u32 [#allocation5], 4
      %s61 = int_to_ptr.vmem [resolvable:$true] %s60
      %63 = dma.vmem_to_hbm [thread:$0]  %s61, 16, %s1, [#allocation4]
    $region17: #{tpu_custom_call.1} parent=1 // pred_fallthru
      _
    // Predicated region
    $region18: #{tpu_custom_call.1} parent=1 // pred_check
      _
    $region19: #{tpu_custom_call.1} parent=1 // pred_check_branch
      %65 = sbr.rel (0) target = $region21
    $region20: #{tpu_custom_call.1} parent=1 // pred_region
      %66 = dma.done [#allocation4], 16
    $region21: #{tpu_custom_call.1} parent=1 // pred_fallthru
      _
    %67 = vsyncpa [#allocation3], 1
    %68 = vsyncpa [#allocation4], 1

</llo_original>
